<compile_context>
chip_gen: v6e
topology: v6e:2x2x1
jax: 0.10.0
libtpu: 0.0.40
codegen_flags: <defaults>
</compile_context>

<pallas_src>
import functools

import jax
import jax.numpy as jnp
from jax.experimental import pallas as pl
from jax.experimental.pallas import tpu as pltpu


def _round_up(x, m):
    return ((x + m - 1) // m) * m


def _cdiv(a, b):
    return -(-a // b)


def _vmem_capacity_bytes():
    try:
        return int(pltpu.get_tpu_info().vmem_capacity_bytes)
    except Exception:
        return 64 * 1024 * 1024  # conservative: v7x per-TensorCore VMEM


def _layernorm_epilogue(h, res_ref, gamma_ref, beta_ref, o_ref, *,
                        eps, n_true, n_pad):
    """TF-style LayerNorm (biased variance, eps inside sqrt) over the TRUE
    hidden size; padded lanes are masked out of both mean and variance."""
    y = h + res_ref[...].astype(jnp.float32)
    if n_pad != n_true:
        col = jax.lax.broadcasted_iota(jnp.int32, y.shape, 1)
        mask = col < n_true
        y = jnp.where(mask, y, 0.0)
    inv_n = jnp.float32(1.0 / n_true)
    u = jnp.sum(y, axis=-1, keepdims=True) * inv_n
    d = y - u
    if n_pad != n_true:
        d = jnp.where(mask, d, 0.0)
    s = jnp.sum(d * d, axis=-1, keepdims=True) * inv_n
    norm = d * jax.lax.rsqrt(s + jnp.float32(eps))
    out = (gamma_ref[...].astype(jnp.float32) * norm
           + beta_ref[...].astype(jnp.float32))
    o_ref[...] = out.astype(o_ref.dtype)


def _fused_kernel(x_ref, w_ref, b_ref, res_ref, gamma_ref, beta_ref, o_ref,
                  *scratch, eps, n_true, n_pad, nk):
    # dense: partial x @ W for this K slab, f32 accumulation on the MXU.
    def partial_dot():
        return jnp.dot(x_ref[...], w_ref[...],
                       preferred_element_type=jnp.float32)

    # dropout: eval/inference mode -> identity.
    # TODO(synk): training-mode dropout (pltpu.prng_seed / prng_random_bits
    # mask) not implemented; forward matches module.eval() semantics.

    if nk == 1:
        # Single K step: no accumulator round-trip at all.
        h = partial_dot() + b_ref[...].astype(jnp.float32)
        _layernorm_epilogue(h, res_ref, gamma_ref, beta_ref, o_ref,
                            eps=eps, n_true=n_true, n_pad=n_pad)
        return

    acc_ref, = scratch
    k = pl.program_id(1)

    @pl.when(k == 0)
    def _():
        # write (not zero-init + RMW) on the first K step.
        acc_ref[...] = partial_dot()

    if nk > 2:
        @pl.when(jnp.logical_and(k > 0, k < nk - 1))
        def _():
            acc_ref[...] += partial_dot()

    @pl.when(k == nk - 1)
    def _():
        # feed the final partial product straight into the epilogue: saves a
        # full tm*Np f32 accumulator store + reload per M tile.
        h = acc_ref[...] + partial_dot() + b_ref[...].astype(jnp.float32)
        _layernorm_epilogue(h, res_ref, gamma_ref, beta_ref, o_ref,
                            eps=eps, n_true=n_true, n_pad=n_pad)


def _select_tiles(M, K, N, x_item, res_item, out_item, tm_max, tk_max):
    """Pick (tm, tk) from dtype, Np and the per-generation VMEM capacity."""
    Np = _round_up(N, 128)
    cap = _vmem_capacity_bytes()
    budget = int(cap * 0.55)                       # tile working-set budget
    vmem_limit = min(int(cap * 0.85), 96 * 1024 * 1024)

    tk = max(128, min(_round_up(tk_max, 128), _round_up(K, 128)))
    tm_cap = max(8, min(_round_up(tm_max, 8), _round_up(M, 8)))

    def fits(tm_v, tk_v):
        nk_v = _cdiv(K, tk_v)
        acc = tm_v * Np * 4 if nk_v > 1 else 0
        tot = (2 * tm_v * tk_v * x_item            # x tile, double-buffered
               + 2 * tk_v * Np * x_item            # W slab, double-buffered
               + 2 * tm_v * Np * res_item          # residual tile
               + 2 * tm_v * Np * out_item          # output tile
               + acc                               # f32 accumulator
               + 6 * Np * 4)                       # bias / gamma / beta
        return tot <= budget

    # Shrink the reduction tile first, then the token tile (critical on v7x's
    # 64 MiB/TC VMEM at large hidden sizes).
    while tk > 256 and not fits(tm_cap, tk):
        tk = _round_up(max(256, tk // 2), 128)
    while tm_cap > 256 and not fits(tm_cap, tk):
        tm_cap = _round_up(max(256, tm_cap // 2), 8)

    # At least 2 token tiles when M is large enough so the "parallel" M axis
    # can span both v7x TensorCores; also minimizes dead padded rows
    # (tm = round_up(cdiv(M, n_tiles), 8) instead of round_up(M, tm)).
    min_m_tiles = 2 if M >= 512 else 1
    n_m_tiles = max(_cdiv(M, tm_cap), min_m_tiles)
    tm = _round_up(_cdiv(M, n_m_tiles), 8)
    Mp = n_m_tiles * tm
    Kp = _round_up(K, tk)
    nk = Kp // tk
    return tm, tk, Np, Mp, Kp, nk, vmem_limit


def output_residual_norm(hidden_states, input_tensor, w, b, gamma, beta, eps,
                         *, compute_dtype=jnp.bfloat16, tm=1024, tk=1024):
    """hidden_states: [M, K], input_tensor: [M, N], w: [K, N] (= PyTorch weight.T),
    b/gamma/beta: [N].  Returns [M, N] in hidden_states.dtype.

    By default the matmul operands are cast to bf16 (native MXU path, half the
    HBM traffic); accumulation and the LayerNorm epilogue stay f32.  Pass
    compute_dtype=jnp.float32 for a full-precision matmul.
    """
    M, K = hidden_states.shape
    Kw, N = w.shape
    assert Kw == K and input_tensor.shape == (M, N)

    out_dtype = hidden_states.dtype

    # bf16 fast path: cast matmul operands BEFORE any padding copy.
    if compute_dtype is not None:
        x_c = hidden_states.astype(compute_dtype)
        w_c = w.astype(compute_dtype)
    else:
        x_c, w_c = hidden_states, w

    x_item = jnp.dtype(x_c.dtype).itemsize
    res_item = jnp.dtype(input_tensor.dtype).itemsize
    out_item = jnp.dtype(out_dtype).itemsize

    tm_eff, tk_eff, Np, Mp, Kp, nk, vmem_limit = _select_tiles(
        M, K, N, x_item, res_item, out_item, tm, tk)

    # Pad only when strictly needed (common aligned case -> zero extra copies).
    def pad2(a, rows, cols):
        if rows == 0 and cols == 0:
            return a
        return jnp.pad(a, ((0, rows), (0, cols)))

    def pad1(a, cols):
        a = a if cols == 0 else jnp.pad(a, (0, cols))
        return a.reshape(1, Np)

    x_p = pad2(x_c, Mp - M, Kp - K)
    w_p = pad2(w_c, Kp - K, Np - N)
    r_p = pad2(input_tensor, Mp - M, Np - N)
    b_p = pad1(b.astype(jnp.float32), Np - N)
    g_p = pad1(gamma.astype(jnp.float32), Np - N)
    be_p = pad1(beta.astype(jnp.float32), Np - N)

    grid = (Mp // tm_eff, nk)
    n_m_tiles = grid[0]

    kernel = functools.partial(_fused_kernel, eps=float(eps),
                               n_true=N, n_pad=Np, nk=nk)

    # dtype-aware cost estimate (advisory, helps XLA schedule neighbours).
    cost = pl.CostEstimate(
        flops=2 * Mp * Kp * Np,
        transcendentals=Mp,  # one rsqrt per token row
        bytes_accessed=(Mp * Kp * x_item                 # x read once
                        + n_m_tiles * Kp * Np * x_item   # W re-streamed per M tile
                        + Mp * Np * res_item             # residual
                        + Mp * Np * out_item             # output
                        + 3 * Np * 4),                   # bias/gamma/beta
    )

    scratch = [pltpu.VMEM((tm_eff, Np), jnp.float32)] if nk > 1 else []

    out_p = pl.pallas_call(
        kernel,
        out_shape=jax.ShapeDtypeStruct((Mp, Np), out_dtype),
        grid_spec=pltpu.PrefetchScalarGridSpec(
            num_scalar_prefetch=0,
            grid=grid,
            in_specs=[
                pl.BlockSpec((tm_eff, tk_eff), lambda i, k: (i, k)),  # x tile
                pl.BlockSpec((tk_eff, Np), lambda i, k: (k, 0)),      # W slab (streamed over K)
                pl.BlockSpec((1, Np), lambda i, k: (0, 0)),           # dense bias
                pl.BlockSpec((tm_eff, Np), lambda i, k: (i, 0)),      # residual tile
                pl.BlockSpec((1, Np), lambda i, k: (0, 0)),           # LN gamma
                pl.BlockSpec((1, Np), lambda i, k: (0, 0)),           # LN beta
            ],
            out_specs=pl.BlockSpec((tm_eff, Np), lambda i, k: (i, 0)),
            scratch_shapes=scratch,
        ),
        compiler_params=pltpu.CompilerParams(
            dimension_semantics=("parallel", "arbitrary"),
            vmem_limit_bytes=vmem_limit,
        ),
        cost_estimate=cost,
    )(x_p, w_p, b_p, r_p, g_p, be_p)

    if Mp == M and Np == N:
        return out_p
    return out_p[:M, :N]


if __name__ == "__main__":
    # config-like sizes (small)
    batch, seq = 2, 8
    intermediate_size = 64
    hidden_size = 32
    layer_norm_eps = 1e-12

    key = jax.random.PRNGKey(0)
    k1, k2, k3 = jax.random.split(key, 3)

    hidden_states = jax.random.normal(
        k1, (batch, seq, intermediate_size), dtype=jnp.float32)
    input_tensor = jax.random.normal(
        k2, (batch, seq, hidden_size), dtype=jnp.float32)

    # nn.Linear(intermediate_size, hidden_size): weight [hidden, intermediate], bias [hidden]
    w_pt = jax.random.normal(
        k3, (hidden_size, intermediate_size), dtype=jnp.float32) * 0.02
    b_pt = jnp.zeros((hidden_size,), dtype=jnp.float32)
    ln_weight = jnp.ones((hidden_size,), dtype=jnp.float32)
    ln_bias = jnp.zeros((hidden_size,), dtype=jnp.float32)

    # flatten tokens, kernel takes W as [K, N]
    M = batch * seq
    x2d = hidden_states.reshape(M, intermediate_size)
    r2d = input_tensor.reshape(M, hidden_size)
    w_kn = w_pt.T  # [intermediate, hidden]

    # default bf16 MXU fast path
    out_fast = output_residual_norm(
        x2d, r2d, w_kn, b_pt, ln_weight, ln_bias, layer_norm_eps)
    # strict f32 compute path for tight numerical verification
    out_f32 = output_residual_norm(
        x2d, r2d, w_kn, b_pt, ln_weight, ln_bias, layer_norm_eps,
        compute_dtype=jnp.float32)
    jax.block_until_ready((out_fast, out_f32))

    # pure-JAX f32 reference
    h_ref = x2d @ w_kn + b_pt
    y_ref = h_ref + r2d
    u = y_ref.mean(-1, keepdims=True)
    s = ((y_ref - u) ** 2).mean(-1, keepdims=True)
    ref = ln_weight * ((y_ref - u) / jnp.sqrt(s + layer_norm_eps)) + ln_bias

    assert jnp.allclose(out_f32, ref, atol=2e-5, rtol=2e-5), \
        "f32-path mismatch vs reference"
    assert jnp.allclose(out_fast, ref, atol=2e-2, rtol=2e-2), \
        "bf16-path mismatch vs reference"
    print("KERNEL_OK")
</pallas_src>

<mosaic_0001>
module attributes {stable_mosaic.version = 11 : i64} {
  func.func @_fused_kernel(%arg0: i32, %arg1: i32, %arg2: memref<16x128xbf16, #tpu.memory_space<vmem>>, %arg3: memref<128x128xbf16, #tpu.memory_space<vmem>>, %arg4: memref<1x128xf32, #tpu.memory_space<vmem>>, %arg5: memref<16x128xf32, #tpu.memory_space<vmem>>, %arg6: memref<1x128xf32, #tpu.memory_space<vmem>>, %arg7: memref<1x128xf32, #tpu.memory_space<vmem>>, %arg8: memref<16x128xf32, #tpu.memory_space<vmem>>) attributes {dimension_semantics = [#tpu.dimension_semantics<parallel>, #tpu.dimension_semantics<arbitrary>], iteration_bounds = array<i64: 1, 1>, scalar_prefetch = 0 : i64, scratch_operands = 0 : i64, tpu.core_type = #tpu.core_type<tc>, window_params = [{transform_indices = @transform_0, window_bounds = array<i64: 16, 128>}, {transform_indices = @transform_1, window_bounds = array<i64: 128, 128>}, {pipeline_mode = #tpu.pipeline_mode<synchronous>, transform_indices = @transform_2, window_bounds = array<i64: 1, 128>}, {transform_indices = @transform_3, window_bounds = array<i64: 16, 128>}, {pipeline_mode = #tpu.pipeline_mode<synchronous>, transform_indices = @transform_4, window_bounds = array<i64: 1, 128>}, {pipeline_mode = #tpu.pipeline_mode<synchronous>, transform_indices = @transform_5, window_bounds = array<i64: 1, 128>}, {transform_indices = @transform_6, window_bounds = array<i64: 16, 128>}]} {
    %c0 = arith.constant 0 : index
    %c0_0 = arith.constant 0 : index
    %0 = vector.load %arg2[%c0, %c0_0] : memref<16x128xbf16, #tpu.memory_space<vmem>>, vector<16x128xbf16>
    %c0_1 = arith.constant 0 : index
    %c0_2 = arith.constant 0 : index
    %1 = vector.load %arg3[%c0_1, %c0_2] : memref<128x128xbf16, #tpu.memory_space<vmem>>, vector<128x128xbf16>
    %cst = arith.constant dense<0.000000e+00> : vector<16x128xf32>
    %2 = tpu.matmul %0, %1, %cst {dimension_numbers = #tpu.dot_dimension_numbers<[1], [0], [0], [1], [0, 0, 1, 1], [], []>} : vector<16x128xbf16>, vector<128x128xbf16>, vector<16x128xf32> -> vector<16x128xf32>
    %c0_3 = arith.constant 0 : index
    %c0_4 = arith.constant 0 : index
    %3 = vector.load %arg4[%c0_3, %c0_4] : memref<1x128xf32, #tpu.memory_space<vmem>>, vector<1x128xf32>
    %4 = vector.broadcast %3 : vector<1x128xf32> to vector<16x128xf32>
    %5 = arith.addf %2, %4 : vector<16x128xf32>
    %c0_5 = arith.constant 0 : index
    %c0_6 = arith.constant 0 : index
    %6 = vector.load %arg5[%c0_5, %c0_6] : memref<16x128xf32, #tpu.memory_space<vmem>>, vector<16x128xf32>
    %7 = arith.addf %5, %6 : vector<16x128xf32>
    %8 = tpu.iota {dimensions = array<i32: 1>} : vector<16x128xi32>
    %c32_i32 = arith.constant 32 : i32
    %9 = vector.broadcast %c32_i32 : i32 to vector<16x128xi32>
    %10 = arith.cmpi slt, %8, %9 : vector<16x128xi32>
    %cst_7 = arith.constant 0.000000e+00 : f32
    %11 = vector.broadcast %cst_7 : f32 to vector<16x128xf32>
    %12 = arith.select %10, %7, %11 : vector<16x128xi1>, vector<16x128xf32>
    %cst_8 = arith.constant dense<0.000000e+00> : vector<16xf32>
    %13 = vector.multi_reduction <add>, %12, %cst_8 [1] : vector<16x128xf32> to vector<16xf32>
    %14 = vector.shape_cast %13 : vector<16xf32> to vector<16x1xf32>
    %cst_9 = arith.constant 3.125000e-02 : f32
    %15 = vector.broadcast %cst_9 : f32 to vector<16x1xf32>
    %16 = arith.mulf %14, %15 : vector<16x1xf32>
    %17 = vector.broadcast %16 : vector<16x1xf32> to vector<16x128xf32>
    %18 = arith.subf %12, %17 : vector<16x128xf32>
    %cst_10 = arith.constant 0.000000e+00 : f32
    %19 = vector.broadcast %cst_10 : f32 to vector<16x128xf32>
    %20 = arith.select %10, %18, %19 : vector<16x128xi1>, vector<16x128xf32>
    %21 = arith.mulf %20, %20 : vector<16x128xf32>
    %cst_11 = arith.constant dense<0.000000e+00> : vector<16xf32>
    %22 = vector.multi_reduction <add>, %21, %cst_11 [1] : vector<16x128xf32> to vector<16xf32>
    %23 = vector.shape_cast %22 : vector<16xf32> to vector<16x1xf32>
    %cst_12 = arith.constant 3.125000e-02 : f32
    %24 = vector.broadcast %cst_12 : f32 to vector<16x1xf32>
    %25 = arith.mulf %23, %24 : vector<16x1xf32>
    %cst_13 = arith.constant 9.99999996E-13 : f32
    %26 = vector.broadcast %cst_13 : f32 to vector<16x1xf32>
    %27 = arith.addf %25, %26 : vector<16x1xf32>
    %28 = math.rsqrt %27 : vector<16x1xf32>
    %29 = vector.broadcast %28 : vector<16x1xf32> to vector<16x128xf32>
    %30 = arith.mulf %20, %29 : vector<16x128xf32>
    %c0_14 = arith.constant 0 : index
    %c0_15 = arith.constant 0 : index
    %31 = vector.load %arg6[%c0_14, %c0_15] : memref<1x128xf32, #tpu.memory_space<vmem>>, vector<1x128xf32>
    %32 = vector.broadcast %31 : vector<1x128xf32> to vector<16x128xf32>
    %33 = arith.mulf %32, %30 : vector<16x128xf32>
    %c0_16 = arith.constant 0 : index
    %c0_17 = arith.constant 0 : index
    %34 = vector.load %arg7[%c0_16, %c0_17] : memref<1x128xf32, #tpu.memory_space<vmem>>, vector<1x128xf32>
    %35 = vector.broadcast %34 : vector<1x128xf32> to vector<16x128xf32>
    %36 = arith.addf %33, %35 : vector<16x128xf32>
    %c0_18 = arith.constant 0 : index
    %c0_19 = arith.constant 0 : index
    %37 = vector.load %arg8[%c0_18, %c0_19] : memref<16x128xf32, #tpu.memory_space<vmem>>, vector<16x128xf32>
    tpu.vector_store %arg8[%c0_18, %c0_19], %36 {strides = array<i32>} : memref<16x128xf32, #tpu.memory_space<vmem>>, vector<16x128xf32>,
    return
  }
  func.func @transform_0(%arg0: i32, %arg1: i32) -> (i32, i32) {
    %c0_i32 = arith.constant 0 : i32
    return %arg0, %arg1 : i32, i32
  }
  func.func @transform_1(%arg0: i32, %arg1: i32) -> (i32, i32) {
    %c0_i32 = arith.constant 0 : i32
    %c0_i32_0 = arith.constant 0 : i32
    return %arg1, %c0_i32 : i32, i32
  }
  func.func @transform_2(%arg0: i32, %arg1: i32) -> (i32, i32) {
    %c0_i32 = arith.constant 0 : i32
    %c0_i32_0 = arith.constant 0 : i32
    %c0_i32_1 = arith.constant 0 : i32
    return %c0_i32, %c0_i32_0 : i32, i32
  }
  func.func @transform_3(%arg0: i32, %arg1: i32) -> (i32, i32) {
    %c0_i32 = arith.constant 0 : i32
    %c0_i32_0 = arith.constant 0 : i32
    return %arg0, %c0_i32 : i32, i32
  }
  func.func @transform_4(%arg0: i32, %arg1: i32) -> (i32, i32) {
    %c0_i32 = arith.constant 0 : i32
    %c0_i32_0 = arith.constant 0 : i32
    %c0_i32_1 = arith.constant 0 : i32
    return %c0_i32, %c0_i32_0 : i32, i32
  }
  func.func @transform_5(%arg0: i32, %arg1: i32) -> (i32, i32) {
    %c0_i32 = arith.constant 0 : i32
    %c0_i32_0 = arith.constant 0 : i32
    %c0_i32_1 = arith.constant 0 : i32
    return %c0_i32, %c0_i32_0 : i32, i32
  }
  func.func @transform_6(%arg0: i32, %arg1: i32) -> (i32, i32) {
    %c0_i32 = arith.constant 0 : i32
    %c0_i32_0 = arith.constant 0 : i32
    return %arg0, %c0_i32 : i32, i32
  }
}

</mosaic_0001>

<llo_original>
// kernel: tpu_custom_call.1
$region0: #{tpu_custom_call.1}
  #allocation0 [shape = 'u32[]', space=smem, size = 0x4, offset = 0x4, fixed_abs, tag = 'smem constant byte address 0x4 - core index']
  #allocation1 [shape = 'u32[144,128]{1,0:T(1,128)}', space=vmem, size = 0x12000, scoped, tag = 'internal scratch']
  %s0 = inlined_call_operand.hbm [shape: bf16[16,128], index: 0, kind: input, shape index: {}]
  %s1 = inlined_call_operand.hbm [shape: bf16[128,128], index: 1, kind: input, shape index: {}]
  %s2 = inlined_call_operand.vmem [shape: f32[1,128], index: 2, kind: input, shape index: {}]
  %s3 = inlined_call_operand.hbm [shape: f32[16,128], index: 3, kind: input, shape index: {}]
  %s4 = inlined_call_operand.vmem [shape: f32[1,128], index: 4, kind: input, shape index: {}]
  %s5 = inlined_call_operand.vmem [shape: f32[1,128], index: 5, kind: input, shape index: {}]
  %s6 = inlined_call_operand.hbm [shape: f32[16,128], index: 6, kind: output, shape index: {}]
  %s7 = sld [smem:[#allocation0]]
  $region46: #{tpu_custom_call.1} parent=0
    _
  %s9 = ssub.s32 1, %s7
  %s10 = scalar_select 0, %s9, %s7
  $region1: #{tpu_custom_call.1} parent=0
    #allocation2 [shape = 'u8[4096]{0}', space=vmem, size = 0x1000, scoped, tag = 'input window, operand 0, single buffered']
    #allocation3 [shape = 's32[1]{0}', space=sflag, size = 0x4, scoped, tag = 'scoped memory for tpu_custom_call.1']
    #allocation4 [shape = 's32[1]{0}', space=sflag, size = 0x4, scoped, tag = 'scoped memory for tpu_custom_call.1']
    #allocation5 [shape = 'u8[32768]{0}', space=vmem, size = 0x8000, scoped, tag = 'input window, operand 1, single buffered']
    #allocation6 [shape = 's32[1]{0}', space=sflag, size = 0x4, scoped, tag = 'scoped memory for tpu_custom_call.1']
    #allocation7 [shape = 'u8[8192]{0}', space=vmem, size = 0x2000, scoped, tag = 'input window, operand 3, single buffered']
    #allocation8 [shape = 'u8[8192]{0}', space=vmem, size = 0x2000, scoped, tag = 'output window, operand 0, single buffered']
    %11 = vsyncpa [#allocation3], 0
    %12 = vsyncpa [#allocation6], 0
    %13 = vsyncpa [#allocation4], 0
    // Predicated region
    $region2: #{tpu_custom_call.1} parent=1 // pred_check
      _
    $region3: #{tpu_custom_call.1} parent=1 // pred_check_branch
      %15 = sbr.rel (0) target = $region5
    $region4: #{tpu_custom_call.1} parent=1 // pred_region
      %s17 = ssub.s32 128, 128
      %18 = vsyncadd [#allocation3], %s17
      %s19 = sshll.u32 [#allocation2], 4
      %s20 = int_to_ptr.vmem [resolvable:$true] %s19
      %25 = dma.hbm_to_vmem [thread:$0]  %s0, 128, %s20, [#allocation3], 64, 64, 4
    $region5: #{tpu_custom_call.1} parent=1 // pred_fallthru
      _
    // Predicated region
    $region6: #{tpu_custom_call.1} parent=1 // pred_check
      _
    $region7: #{tpu_custom_call.1} parent=1 // pred_check_branch
      %27 = sbr.rel (0) target = $region9
    $region8: #{tpu_custom_call.1} parent=1 // pred_region
      %s29 = ssub.s32 1024, 1024
      %30 = vsyncadd [#allocation6], %s29
      %s31 = sshll.u32 [#allocation5], 4
      %s32 = int_to_ptr.vmem [resolvable:$true] %s31
      %37 = dma.hbm_to_vmem [thread:$0]  %s1, 1024, %s32, [#allocation6], 64, 64, 4
    $region9: #{tpu_custom_call.1} parent=1 // pred_fallthru
      _
    // Predicated region
    $region10: #{tpu_custom_call.1} parent=1 // pred_check
      _
    $region11: #{tpu_custom_call.1} parent=1 // pred_check_branch
      %39 = sbr.rel (0) target = $region13
    $region12: #{tpu_custom_call.1} parent=1 // pred_region
      _
    $region13: #{tpu_custom_call.1} parent=1 // pred_fallthru
      _
    // Predicated region
    $region14: #{tpu_custom_call.1} parent=1 // pred_check
      _
    $region15: #{tpu_custom_call.1} parent=1 // pred_check_branch
      %41 = sbr.rel (0) target = $region17
    $region16: #{tpu_custom_call.1} parent=1 // pred_region
      %s43 = ssub.s32 256, 256
      %44 = vsyncadd [#allocation6], %s43
      %s45 = sshll.u32 [#allocation7], 4
      %s46 = int_to_ptr.vmem [resolvable:$true] %s45
      %51 = dma.hbm_to_vmem [thread:$0]  %s3, 256, %s46, [#allocation6], 128, 128, 8
    $region17: #{tpu_custom_call.1} parent=1 // pred_fallthru
      _
    // Predicated region
    $region18: #{tpu_custom_call.1} parent=1 // pred_check
      _
    $region19: #{tpu_custom_call.1} parent=1 // pred_check_branch
      %53 = sbr.rel (0) target = $region21
    $region20: #{tpu_custom_call.1} parent=1 // pred_region
      _
    $region21: #{tpu_custom_call.1} parent=1 // pred_fallthru
      _
    // Predicated region
    $region22: #{tpu_custom_call.1} parent=1 // pred_check
      _
    $region23: #{tpu_custom_call.1} parent=1 // pred_check_branch
      %55 = sbr.rel (0) target = $region25
    $region24: #{tpu_custom_call.1} parent=1 // pred_region
      _
    $region25: #{tpu_custom_call.1} parent=1 // pred_fallthru
      _
    // Predicated region
    $region26: #{tpu_custom_call.1} parent=1 // pred_check
      _
    $region27: #{tpu_custom_call.1} parent=1 // pred_check_branch
      %57 = sbr.rel (0) target = $region29
    $region28: #{tpu_custom_call.1} parent=1 // pred_region
      %58 = dma.done [#allocation3], 128
    $region29: #{tpu_custom_call.1} parent=1 // pred_fallthru
      _
    // Predicated region
    $region30: #{tpu_custom_call.1} parent=1 // pred_check
      _
    $region31: #{tpu_custom_call.1} parent=1 // pred_check_branch
      %60 = sbr.rel (0) target = $region33
    $region32: #{tpu_custom_call.1} parent=1 // pred_region
      %61 = dma.done [#allocation6], 1024
    $region33: #{tpu_custom_call.1} parent=1 // pred_fallthru
      _
    // Predicated region
    $region34: #{tpu_custom_call.1} parent=1 // pred_check
      _
    $region35: #{tpu_custom_call.1} parent=1 // pred_check_branch
      %63 = sbr.rel (0) target = $region37
    $region36: #{tpu_custom_call.1} parent=1 // pred_region
      %64 = dma.done [#allocation6], 256
    $region37: #{tpu_custom_call.1} parent=1 // pred_fallthru
      _
    %v66 = vld [vmem:[#allocation2] sm:$0xf]
    %v67 = vld [vmem:[#allocation2 + $0x4] sm:$0xf]
    %v68 = vld [vmem:[#allocation5] sm:$0xf]
    %v69 = vld [vmem:[#allocation5 + $0x4] sm:$0xf]
    %v70 = vld [vmem:[#allocation5 + $0x8] sm:$0xf]
    %v71 = vld [vmem:[#allocation5 + $0xc] sm:$0xf]
    %v72 = vld [vmem:[#allocation5 + $0x10] sm:$0xf]
    %v73 = vld [vmem:[#allocation5 + $0x14] sm:$0xf]
    %v74 = vld [vmem:[#allocation5 + $0x18] sm:$0xf]
    %v75 = vld [vmem:[#allocation5 + $0x1c] sm:$0xf]
    %v76 = vld [vmem:[#allocation5 + $0x20] sm:$0xf]
    %v77 = vld [vmem:[#allocation5 + $0x24] sm:$0xf]
    %v78 = vld [vmem:[#allocation5 + $0x28] sm:$0xf]
    %v79 = vld [vmem:[#allocation5 + $0x2c] sm:$0xf]
    %v80 = vld [vmem:[#allocation5 + $0x30] sm:$0xf]
    %v81 = vld [vmem:[#allocation5 + $0x34] sm:$0xf]
    %v82 = vld [vmem:[#allocation5 + $0x38] sm:$0xf]
    %v83 = vld [vmem:[#allocation5 + $0x3c] sm:$0xf]
    %v84 = vld [vmem:[%s2] sm:$0x1]
    %v86 = vlaneseq
    %v87 = vshrl.u32 %v86, 7
    %v88 = vsub.s32 0, %v87
    %v89 = vrot.slane %v84, %v88
    %v93 = vunpack.c.l.b16 %v66
    %v94 = vunpack.c.l.b16 %v67
    %v95 = vpack.c.b16 %v94, %v93
    %v113 = vunpack.c.l.b16 %v68
    %v114 = vunpack.c.l.b16 %v69
    %v115 = vunpack.c.l.b16 %v70
    %v116 = vunpack.c.l.b16 %v71
    %v117 = vunpack.c.l.b16 %v72
    %v118 = vunpack.c.l.b16 %v73
    %v119 = vunpack.c.l.b16 %v74
    %v120 = vunpack.c.l.b16 %v75
    %v121 = vunpack.c.l.b16 %v76
    %v122 = vunpack.c.l.b16 %v77
    %v123 = vunpack.c.l.b16 %v78
    %v124 = vunpack.c.l.b16 %v79
    %v125 = vunpack.c.l.b16 %v80
    %v126 = vunpack.c.l.b16 %v81
    %v127 = vunpack.c.l.b16 %v82
    %v128 = vunpack.c.l.b16 %v83
    %v129 = vpack.c.b16 %v114, %v113
    %v130 = vpack.c.b16 %v116, %v115
    %v131 = vpack.c.b16 %v118, %v117
    %v132 = vpack.c.b16 %v120, %v119
    %v133 = vpack.c.b16 %v122, %v121
    %v134 = vpack.c.b16 %v124, %v123
    %v135 = vpack.c.b16 %v126, %v125
    %v136 = vpack.c.b16 %v128, %v127
    %145 = vmatprep.subr.bf16.mxu0 0
    %146 = vmatpush1.bf16.msra.mxu0 %v136
    %147 = vmatprep.subr.bf16.mxu0 0
    %148 = vmatpush1.bf16.msra.mxu0 %v135
    %149 = vmatprep.subr.bf16.mxu0 0
    %150 = vmatpush1.bf16.msra.mxu0 %v134
    %151 = vmatprep.subr.bf16.mxu0 0
    %152 = vmatpush1.bf16.msra.mxu0 %v133
    %153 = vmatprep.subr.bf16.mxu0 0
    %154 = vmatpush1.bf16.msra.mxu0 %v132
    %155 = vmatprep.subr.bf16.mxu0 0
    %156 = vmatpush1.bf16.msra.mxu0 %v131
    %157 = vmatprep.subr.bf16.mxu0 0
    %158 = vmatpush1.bf16.msra.mxu0 %v130
    %159 = vmatprep.subr.bf16.mxu0 0
    %160 = vmatpush1.bf16.msra.mxu0 %v129
    %161 = vmatprep.subr.bf16.mxu0 0
    %162 = vmatpush2.bf16.msra.mxu0 0
    %163 = vmatprep.subr.bf16.mxu0 0
    %164 = vmatpush2.bf16.msra.mxu0 0
    %165 = vmatprep.subr.bf16.mxu0 0
    %166 = vmatpush2.bf16.msra.mxu0 0
    %167 = vmatprep.subr.bf16.mxu0 0
    %168 = vmatpush2.bf16.msra.mxu0 0
    %169 = vmatprep.subr.bf16.mxu0 0
    %170 = vmatpush2.bf16.msra.mxu0 0
    %171 = vmatprep.subr.bf16.mxu0 0
    %172 = vmatpush2.bf16.msra.mxu0 0
    %173 = vmatprep.subr.bf16.mxu0 0
    %174 = vmatpush2.bf16.msra.mxu0 0
    %175 = vmatprep.subr.bf16.mxu0 0
    %176 = vmatpush2.bf16.msra.mxu0 0
    %177 = vmatprep.mubr.bf16.mxu0 0
    %178 = vmatmul.mubr.bf16.gmra.mxu0 %v95
    %v179 = vpop.f32.mrf.mxu0
    %v180 = vadd.f32 %v89, %v179
    %v181 = vpop.f32.mrf.mxu0
    %v182 = vpop.f32.mrf.mxu0
    %v183 = vadd.f32 %v89, %v182
    %v184 = vpop.f32.mrf.mxu0
    %185 = vdwg.mxu0
    %v186 = vld [vmem:[#allocation7] sm:$0xff]
    %v187 = vld [vmem:[#allocation7 + $0x8] sm:$0xff]
    %v188 = vadd.f32 %v180, %v186
    %v189 = vadd.f32 %v183, %v187
    %v190 = vlaneseq
    %v191 = vand.u32 %v190, 127
    %vm192 = vcmp.lt.s32.totalorder %v191, 32
    %v193 = vsel %vm192, %v188, 0.0
    %v194 = vsel %vm192, %v189, 0.0
    %195 = vadd.xlane.f32.xlu0 %v193
    %v196 = vpop.xlane.xlu0 %195
    %197 = vadd.xlane.f32.xlu0 %v194
    %v198 = vpop.xlane.xlu0 %197
    %v199 = vmul.f32 %v196, 0.03125
    %v200 = vmul.f32 %v198, 0.03125
    %v201 = vsub.f32 %v193, %v199
    %v202 = vsub.f32 %v194, %v200
    %v203 = vsel %vm192, %v201, 0.0
    %v204 = vsel %vm192, %v202, 0.0
    %v205 = vmul.f32 %v203, %v203
    %v206 = vmul.f32 %v204, %v204
    %207 = vadd.xlane.f32.xlu0 %v205
    %v208 = vpop.xlane.xlu0 %207
    %209 = vadd.xlane.f32.xlu0 %v206
    %v210 = vpop.xlane.xlu0 %209
    %v211 = vmul.f32 %v208, 0.03125
    %v212 = vmul.f32 %v210, 0.03125
    %v213 = vadd.f32 %v211, 1e-12
    %v214 = vadd.f32 %v212, 1e-12
    %v215 = vrsqrt.pop %v213
    %v216 = vrsqrt.pop %v214
    %v217 = vmul.f32 %v203, %v215
    %v218 = vmul.f32 %v204, %v216
    %v219 = vld [vmem:[%s4] sm:$0x1]
    %v221 = vlaneseq
    %v222 = vshrl.u32 %v221, 7
    %v223 = vsub.s32 0, %v222
    %v224 = vrot.slane %v219, %v223
    %v226 = vmul.f32 %v224, %v217
    %v227 = vmul.f32 %v224, %v218
    %v228 = vld [vmem:[%s5] sm:$0x1]
    %v230 = vlaneseq
    %v231 = vshrl.u32 %v230, 7
    %v232 = vsub.s32 0, %v231
    %v233 = vrot.slane %v228, %v232
    %v235 = vadd.f32 %v226, %v233
    %v236 = vadd.f32 %v227, %v233
    %237 = vst [vmem:[#allocation8] sm:$0xff] %v235
    %238 = vst [vmem:[#allocation8 + $0x8] sm:$0xff] %v236
    // Predicated region
    $region38: #{tpu_custom_call.1} parent=1 // pred_check
      _
    $region39: #{tpu_custom_call.1} parent=1 // pred_check_branch
      %240 = sbr.rel (0) target = $region41
    $region40: #{tpu_custom_call.1} parent=1 // pred_region
      %s242 = ssub.s32 256, 256
      %243 = vsyncadd [#allocation4], %s242
      %s244 = sshll.u32 [#allocation8], 4
      %s245 = int_to_ptr.vmem [resolvable:$true] %s244
      %250 = dma.vmem_to_hbm [thread:$0]  %s245, 256, %s6, [#allocation4], 128, 128, 8
    $region41: #{tpu_custom_call.1} parent=1 // pred_fallthru
      _
    // Predicated region
    $region42: #{tpu_custom_call.1} parent=1 // pred_check
      _
    $region43: #{tpu_custom_call.1} parent=1 // pred_check_branch
      %252 = sbr.rel (0) target = $region45
    $region44: #{tpu_custom_call.1} parent=1 // pred_region
      %253 = dma.done [#allocation4], 256
    $region45: #{tpu_custom_call.1} parent=1 // pred_fallthru
      _
    %254 = vsyncpa [#allocation3], 1
    %255 = vsyncpa [#allocation6], 1
    %256 = vsyncpa [#allocation4], 1

</llo_original>
